<compile_context>
chip_gen: v7x
topology: tpu7x:2x2x1
jax: 0.10.0
libtpu: 0.0.40
codegen_flags: <defaults>
</compile_context>

<pallas_src>
import jax
import jax.numpy as jnp
from jax.experimental import pallas as pl
from jax.experimental.pallas import tpu as pltpu


def critic_kernel(x_ref, w1_ref, b1_ref, w2_ref, b2_ref, o_ref):
    # Layer 1: (TB, IN) @ (IN, H) on the MXU, accumulate in f32; bias + ReLU on VPU.
    h = jnp.dot(x_ref[...], w1_ref[...], preferred_element_type=jnp.float32)
    h = jnp.maximum(h + b1_ref[...], 0.0)                 # (TB, H), f32

    # Layer 2 (hidden -> 1): VPU multiply + cross-lane (XLU) reduction instead
    # of a near-empty N=1 MXU pass.
    v = jnp.sum(h * w2_ref[...], axis=-1)                 # (TB,), f32
    v = v + b2_ref[0, 0]                                  # SMEM scalar bias

    # Lane-dense store: batch along lanes -> unmasked vector stores.
    o_ref[...] = v[None, :].astype(o_ref.dtype)           # (1, TB)


def _round_up(x, m):
    return (x + m - 1) // m * m


def critic_forward(state, w1, b1, w2_row, b2, *, block_b=1024, activation_dtype=None):
    """Critic forward pass.

    state:  (B, num_inputs) f32
    w1:     (num_inputs, hidden)   -- transposed vs. PyTorch's (hidden, num_inputs)
    b1:     (1, hidden)
    w2_row: (1, hidden)            -- PyTorch's critic_linear2.weight, shape (1, hidden)
    b2:     (1, 1)
    returns (B, 1) f32
    """
    B, num_inputs = state.shape
    hidden = w1.shape[1]

    # Optional bf16 inputs for the mem-bound large-batch case (v5e/v6e):
    # matmul still accumulates in f32 via preferred_element_type.
    if activation_dtype is not None:
        state = state.astype(activation_dtype)
        w1 = w1.astype(activation_dtype)

    # Batch tile: multiple of 128 so the (1, tb) output row is lane-dense;
    # clamp so tiny batches don't over-pad.
    tb = min(block_b, _round_up(B, 128))
    b_padded = _round_up(B, tb)
    if b_padded != B:
        state = jnp.pad(state, ((0, b_padded - B), (0, 0)))
    num_tiles = b_padded // tb

    out = pl.pallas_call(
        critic_kernel,
        out_shape=jax.ShapeDtypeStruct((num_tiles, tb), jnp.float32),
        grid=(num_tiles,),
        in_specs=[
            pl.BlockSpec((tb, num_inputs), lambda i: (i, 0)),      # state tile
            pl.BlockSpec((num_inputs, hidden), lambda i: (0, 0)),  # w1 (resident)
            pl.BlockSpec((1, hidden), lambda i: (0, 0)),           # b1 (resident)
            pl.BlockSpec((1, hidden), lambda i: (0, 0)),           # w2 row (resident)
            pl.BlockSpec(memory_space=pltpu.MemorySpace.SMEM),     # b2 scalar
        ],
        out_specs=pl.BlockSpec((1, tb), lambda i: (i, 0)),
        compiler_params=pltpu.CompilerParams(
            dimension_semantics=("parallel",),
        ),
    )(state, w1, b1, w2_row, b2)

    # (num_tiles, tb) row-major == padded batch order; back to (B, 1).
    return out.reshape(-1, 1)[:B]


def init_critic_params(key, num_inputs, hidden_size):
    """Deterministic init mirroring PyTorch nn.Linear defaults
    (uniform(-1/sqrt(fan_in), 1/sqrt(fan_in)))."""
    k1, k2, k3, k4 = jax.random.split(key, 4)
    bound1 = 1.0 / (num_inputs ** 0.5)
    bound2 = 1.0 / (hidden_size ** 0.5)
    w1 = jax.random.uniform(k1, (num_inputs, hidden_size), jnp.float32,
                            -bound1, bound1)
    b1 = jax.random.uniform(k2, (1, hidden_size), jnp.float32, -bound1, bound1)
    w2_row = jax.random.uniform(k3, (1, hidden_size), jnp.float32,
                                -bound2, bound2)
    b2 = jax.random.uniform(k4, (1, 1), jnp.float32, -bound2, bound2)
    return w1, b1, w2_row, b2


if __name__ == "__main__":
    # Small shapes consistent with the module: batch=8, num_inputs=32, hidden=32.
    # NOTE: at these shapes the call is launch-overhead dominated; the tiling /
    # layout choices above are for the large-batch case.
    B, NUM_INPUTS, HIDDEN = 8, 32, 32

    key = jax.random.PRNGKey(0)
    k_state, k_params = jax.random.split(key)
    state = jax.random.normal(k_state, (B, NUM_INPUTS), jnp.float32)
    w1, b1, w2_row, b2 = init_critic_params(k_params, NUM_INPUTS, HIDDEN)

    value = critic_forward(state, w1, b1, w2_row, b2)
    value = jax.block_until_ready(value)

    # Pure-JAX reference check of the forward semantics.
    ref = jnp.maximum(state @ w1 + b1, 0.0) @ w2_row.T + b2
    assert value.shape == (B, 1)
    assert jnp.allclose(value, ref, atol=1e-5, rtol=1e-5)

    print("KERNEL_OK")
</pallas_src>

<mosaic_0001>
module attributes {stable_mosaic.version = 11 : i64} {
  func.func @critic_kernel(%arg0: i32, %arg1: memref<128x32xf32, #tpu.memory_space<vmem>>, %arg2: memref<32x32xf32, #tpu.memory_space<vmem>>, %arg3: memref<1x32xf32, #tpu.memory_space<vmem>>, %arg4: memref<1x32xf32, #tpu.memory_space<vmem>>, %arg5: memref<1x1xf32, #tpu.memory_space<smem>>, %arg6: memref<1x128xf32, #tpu.memory_space<vmem>>) attributes {dimension_semantics = [#tpu.dimension_semantics<parallel>], iteration_bounds = array<i64: 1>, scalar_prefetch = 0 : i64, scratch_operands = 0 : i64, tpu.core_type = #tpu.core_type<tc>, window_params = [{transform_indices = @transform_0, window_bounds = array<i64: 128, 32>}, {pipeline_mode = #tpu.pipeline_mode<synchronous>, transform_indices = @transform_1, window_bounds = array<i64: 32, 32>}, {pipeline_mode = #tpu.pipeline_mode<synchronous>, transform_indices = @transform_2, window_bounds = array<i64: 1, 32>}, {pipeline_mode = #tpu.pipeline_mode<synchronous>, transform_indices = @transform_3, window_bounds = array<i64: 1, 32>}, {transform_indices = @transform_4, window_bounds = array<i64: 1, 1>}, {transform_indices = @transform_5, window_bounds = array<i64: 1, 128>}]} {
    %c0 = arith.constant 0 : index
    %c0_0 = arith.constant 0 : index
    %0 = vector.load %arg1[%c0, %c0_0] : memref<128x32xf32, #tpu.memory_space<vmem>>, vector<128x32xf32>
    %c0_1 = arith.constant 0 : index
    %c0_2 = arith.constant 0 : index
    %1 = vector.load %arg2[%c0_1, %c0_2] : memref<32x32xf32, #tpu.memory_space<vmem>>, vector<32x32xf32>
    %cst = arith.constant dense<0.000000e+00> : vector<128x32xf32>
    %2 = tpu.matmul %0, %1, %cst {dimension_numbers = #tpu.dot_dimension_numbers<[1], [0], [0], [1], [0, 0, 1, 1], [], []>} : vector<128x32xf32>, vector<32x32xf32>, vector<128x32xf32> -> vector<128x32xf32>
    %c0_3 = arith.constant 0 : index
    %c0_4 = arith.constant 0 : index
    %3 = vector.load %arg3[%c0_3, %c0_4] : memref<1x32xf32, #tpu.memory_space<vmem>>, vector<1x32xf32>
    %4 = vector.broadcast %3 : vector<1x32xf32> to vector<128x32xf32>
    %5 = arith.addf %2, %4 : vector<128x32xf32>
    %cst_5 = arith.constant 0.000000e+00 : f32
    %6 = vector.broadcast %cst_5 : f32 to vector<128x32xf32>
    %7 = arith.maximumf %5, %6 : vector<128x32xf32>
    %c0_6 = arith.constant 0 : index
    %c0_7 = arith.constant 0 : index
    %8 = vector.load %arg4[%c0_6, %c0_7] : memref<1x32xf32, #tpu.memory_space<vmem>>, vector<1x32xf32>
    %9 = vector.broadcast %8 : vector<1x32xf32> to vector<128x32xf32>
    %10 = arith.mulf %7, %9 : vector<128x32xf32>
    %cst_8 = arith.constant dense<0.000000e+00> : vector<128xf32>
    %11 = vector.multi_reduction <add>, %10, %cst_8 [1] : vector<128x32xf32> to vector<128xf32>
    %c0_9 = arith.constant 0 : index
    %c0_10 = arith.constant 0 : index
    %12 = memref.load %arg5[%c0_9, %c0_10] : memref<1x1xf32, #tpu.memory_space<smem>>
    %13 = vector.broadcast %12 : f32 to vector<128xf32>
    %14 = arith.addf %11, %13 : vector<128xf32>
    %15 = vector.shape_cast %14 : vector<128xf32> to vector<1x128xf32>
    %c0_11 = arith.constant 0 : index
    %c0_12 = arith.constant 0 : index
    %16 = vector.load %arg6[%c0_11, %c0_12] : memref<1x128xf32, #tpu.memory_space<vmem>>, vector<1x128xf32>
    tpu.vector_store %arg6[%c0_11, %c0_12], %15 {strides = array<i32>} : memref<1x128xf32, #tpu.memory_space<vmem>>, vector<1x128xf32>,
    return
  }
  func.func @transform_0(%arg0: i32) -> (i32, i32) {
    %c0_i32 = arith.constant 0 : i32
    %c0_i32_0 = arith.constant 0 : i32
    return %arg0, %c0_i32 : i32, i32
  }
  func.func @transform_1(%arg0: i32) -> (i32, i32) {
    %c0_i32 = arith.constant 0 : i32
    %c0_i32_0 = arith.constant 0 : i32
    %c0_i32_1 = arith.constant 0 : i32
    return %c0_i32, %c0_i32_0 : i32, i32
  }
  func.func @transform_2(%arg0: i32) -> (i32, i32) {
    %c0_i32 = arith.constant 0 : i32
    %c0_i32_0 = arith.constant 0 : i32
    %c0_i32_1 = arith.constant 0 : i32
    return %c0_i32, %c0_i32_0 : i32, i32
  }
  func.func @transform_3(%arg0: i32) -> (i32, i32) {
    %c0_i32 = arith.constant 0 : i32
    %c0_i32_0 = arith.constant 0 : i32
    %c0_i32_1 = arith.constant 0 : i32
    return %c0_i32, %c0_i32_0 : i32, i32
  }
  func.func @transform_4(%arg0: i32) -> (i32, i32) {
    %c0_i32 = arith.constant 0 : i32
    %c0_i32_0 = arith.constant 0 : i32
    %c0_i32_1 = arith.constant 0 : i32
    return %c0_i32, %c0_i32_0 : i32, i32
  }
  func.func @transform_5(%arg0: i32) -> (i32, i32) {
    %c0_i32 = arith.constant 0 : i32
    %c0_i32_0 = arith.constant 0 : i32
    return %arg0, %c0_i32 : i32, i32
  }
}

</mosaic_0001>

<llo_original>
// kernel: tpu_custom_call.1
$region0: #{tpu_custom_call.1}
  #allocation0 [shape = 'u32[]', space=smem, size = 0x4, offset = 0x4, fixed_abs, tag = 'smem constant byte address 0x4 - core index']
  #allocation1 [shape = 'u32[144,128]{1,0:T(1,128)}', space=vmem, size = 0x12000, scoped, tag = 'internal scratch']
  #allocation2 [shape = 'f32[1,1]{1,0:T(1,128)S(6)}', space=smem, size = 0x200, scoped, tag = 'scoped memory for tpu_custom_call.1']
  %s0 = inlined_call_operand.vmem [shape: f32[128,32], index: 0, kind: input, shape index: {}]
  %s1 = inlined_call_operand.vmem [shape: f32[32,32], index: 1, kind: input, shape index: {}]
  %s2 = inlined_call_operand.vmem [shape: f32[1,32], index: 2, kind: input, shape index: {}]
  %s3 = inlined_call_operand.vmem [shape: f32[1,32], index: 3, kind: input, shape index: {}]
  %s4 = inlined_call_operand.<no memory space> [shape: f32[1,1], index: 4, kind: input, shape index: {}]
  %s5 = inlined_call_operand.hbm [shape: f32[1,128], index: 5, kind: output, shape index: {}]
  %s6 = sld [smem:[#allocation0]]
  $region30: #{tpu_custom_call.1} parent=0
    _
  %s8 = ssub.s32 1, %s6
  %s9 = scalar_select 0, %s8, %s6
  %10 = sst [smem:[#allocation2]] %s4
  $region1: #{tpu_custom_call.1} parent=0
    #allocation3 [shape = 'u8[512]{0}', space=vmem, size = 0x400, scoped, tag = 'output window, operand 0, single buffered']
    #allocation4 [shape = 's32[1]{0}', space=sflag, size = 0x4, scoped, tag = 'scoped memory for tpu_custom_call.1']
    %11 = vsyncpa [#allocation4], 0
    // Predicated region
    $region2: #{tpu_custom_call.1} parent=1 // pred_check
      _
    $region3: #{tpu_custom_call.1} parent=1 // pred_check_branch
      %13 = sbr.rel (0) target = $region5
    $region4: #{tpu_custom_call.1} parent=1 // pred_region
      _
    $region5: #{tpu_custom_call.1} parent=1 // pred_fallthru
      _
    // Predicated region
    $region6: #{tpu_custom_call.1} parent=1 // pred_check
      _
    $region7: #{tpu_custom_call.1} parent=1 // pred_check_branch
      %15 = sbr.rel (0) target = $region9
    $region8: #{tpu_custom_call.1} parent=1 // pred_region
      _
    $region9: #{tpu_custom_call.1} parent=1 // pred_fallthru
      _
    // Predicated region
    $region10: #{tpu_custom_call.1} parent=1 // pred_check
      _
    $region11: #{tpu_custom_call.1} parent=1 // pred_check_branch
      %17 = sbr.rel (0) target = $region13
    $region12: #{tpu_custom_call.1} parent=1 // pred_region
      _
    $region13: #{tpu_custom_call.1} parent=1 // pred_fallthru
      _
    // Predicated region
    $region14: #{tpu_custom_call.1} parent=1 // pred_check
      _
    $region15: #{tpu_custom_call.1} parent=1 // pred_check_branch
      %19 = sbr.rel (0) target = $region17
    $region16: #{tpu_custom_call.1} parent=1 // pred_region
      _
    $region17: #{tpu_custom_call.1} parent=1 // pred_fallthru
      _
    // Predicated region
    $region18: #{tpu_custom_call.1} parent=1 // pred_check
      _
    $region19: #{tpu_custom_call.1} parent=1 // pred_check_branch
      %21 = sbr.rel (0) target = $region21
    $region20: #{tpu_custom_call.1} parent=1 // pred_region
      _
    $region21: #{tpu_custom_call.1} parent=1 // pred_fallthru
      _
    %v22 = vld [vmem:[%s0] sm:$0xff]
    %v23 = vld [vmem:[%s0 + $0x8] sm:$0xff]
    %v24 = vld [vmem:[%s0 + $0x10] sm:$0xff]
    %v25 = vld [vmem:[%s0 + $0x18] sm:$0xff]
    %v26 = vld [vmem:[%s0 + $0x20] sm:$0xff]
    %v27 = vld [vmem:[%s0 + $0x28] sm:$0xff]
    %v28 = vld [vmem:[%s0 + $0x30] sm:$0xff]
    %v29 = vld [vmem:[%s0 + $0x38] sm:$0xff]
    %v30 = vld [vmem:[%s0 + $0x40] sm:$0xff]
    %v31 = vld [vmem:[%s0 + $0x48] sm:$0xff]
    %v32 = vld [vmem:[%s0 + $0x50] sm:$0xff]
    %v33 = vld [vmem:[%s0 + $0x58] sm:$0xff]
    %v34 = vld [vmem:[%s0 + $0x60] sm:$0xff]
    %v35 = vld [vmem:[%s0 + $0x68] sm:$0xff]
    %v36 = vld [vmem:[%s0 + $0x70] sm:$0xff]
    %v37 = vld [vmem:[%s0 + $0x78] sm:$0xff]
    %v38 = vld [vmem:[%s1] sm:$0xff]
    %v39 = vld [vmem:[%s1 + $0x8] sm:$0xff]
    %v40 = vld [vmem:[%s1 + $0x10] sm:$0xff]
    %v41 = vld [vmem:[%s1 + $0x18] sm:$0xff]
    %v42 = vld [vmem:[%s2] sm:$0x1]
    %v44 = vlaneseq
    %v45 = vshrl.u32 %v44, 7
    %v46 = vsub.s32 0, %v45
    %v47 = vrot.slane %v42, %v46
    %vm49 = vcmask 261120
    %v51 = vsel %vm49, %v22, 0
    %v54 = vsel %vm49, %v23, 0
    %v57 = vsel %vm49, %v24, 0
    %v60 = vsel %vm49, %v25, 0
    %v63 = vsel %vm49, %v26, 0
    %v66 = vsel %vm49, %v27, 0
    %v69 = vsel %vm49, %v28, 0
    %v72 = vsel %vm49, %v29, 0
    %v75 = vsel %vm49, %v30, 0
    %v78 = vsel %vm49, %v31, 0
    %v81 = vsel %vm49, %v32, 0
    %v84 = vsel %vm49, %v33, 0
    %v87 = vsel %vm49, %v34, 0
    %v90 = vsel %vm49, %v35, 0
    %v93 = vsel %vm49, %v36, 0
    %v96 = vsel %vm49, %v37, 0
    %98 = vmatprep.subr.mxu0 0.0
    %99 = vmatpush1.msra.mxu0 %v38
    %100 = vmatprep.subr.mxu0 0.0
    %101 = vmatpush1.msra.mxu0 %v39
    %102 = vmatprep.subr.mxu0 0.0
    %103 = vmatpush1.msra.mxu0 %v40
    %104 = vmatprep.subr.mxu0 0.0
    %105 = vmatpush1.msra.mxu0 %v41
    %106 = vmatprep.subr.mxu0 0.0
    %107 = vmatpush1.msra.mxu0 0.0
    %108 = vmatprep.subr.mxu0 0.0
    %109 = vmatpush1.msra.mxu0 0.0
    %110 = vmatprep.subr.mxu0 0.0
    %111 = vmatpush1.msra.mxu0 0.0
    %112 = vmatprep.subr.mxu0 0.0
    %113 = vmatpush1.msra.mxu0 0.0
    %114 = vmatprep.subr.mxu0 0.0
    %115 = vmatpush1.msra.mxu0 0.0
    %116 = vmatprep.subr.mxu0 0.0
    %117 = vmatpush1.msra.mxu0 0.0
    %118 = vmatprep.subr.mxu0 0.0
    %119 = vmatpush1.msra.mxu0 0.0
    %120 = vmatprep.subr.mxu0 0.0
    %121 = vmatpush1.msra.mxu0 0.0
    %122 = vmatprep.subr.mxu0 0.0
    %123 = vmatpush1.msra.mxu0 0.0
    %124 = vmatprep.subr.mxu0 0.0
    %125 = vmatpush1.msra.mxu0 0.0
    %126 = vmatprep.subr.mxu0 0.0
    %127 = vmatpush1.msra.mxu0 0.0
    %128 = vmatprep.subr.mxu0 0.0
    %129 = vmatpush1.msra.mxu0 0.0
    %130 = vmatprep.subr.mxu0 0.0
    %131 = vmatpush1.msra.mxu0 0.0
    %132 = vmatprep.subr.mxu0 0.0
    %133 = vmatpush1.msra.mxu0 0.0
    %134 = vmatprep.subr.mxu0 0.0
    %135 = vmatpush1.msra.mxu0 0.0
    %136 = vmatprep.subr.mxu0 0.0
    %137 = vmatpush1.msra.mxu0 0.0
    %138 = vmatprep.subr.mxu0 0.0
    %139 = vmatpush1.msra.mxu0 0.0
    %140 = vmatprep.subr.mxu0 0.0
    %141 = vmatpush1.msra.mxu0 0.0
    %142 = vmatprep.subr.mxu0 0.0
    %143 = vmatpush1.msra.mxu0 0.0
    %144 = vmatprep.subr.mxu0 0.0
    %145 = vmatpush1.msra.mxu0 0.0
    %146 = vmatprep.subr.mxu0 0.0
    %147 = vmatpush1.msra.mxu0 0.0
    %148 = vmatprep.subr.mxu0 0.0
    %149 = vmatpush1.msra.mxu0 0.0
    %150 = vmatprep.subr.mxu0 0.0
    %151 = vmatpush1.msra.mxu0 0.0
    %152 = vmatprep.subr.mxu0 0.0
    %153 = vmatpush1.msra.mxu0 0.0
    %154 = vmatprep.subr.mxu0 0.0
    %155 = vmatpush1.msra.mxu0 0.0
    %156 = vmatprep.subr.mxu0 0.0
    %157 = vmatpush1.msra.mxu0 0.0
    %158 = vmatprep.subr.mxu0 0.0
    %159 = vmatpush1.msra.mxu0 0.0
    %160 = vmatprep.subr.mxu0 0.0
    %161 = vmatpush1.msra.mxu0 0.0
    %162 = vmatprep.mubr.f32.mxu0 0.0
    %163 = vmatmul.mubr.f32.gmra.mrb[0].mxu0 %v51
    %v164 = vpop.f32.mrb[0].mxu0
    %v165 = vadd.f32 %v47, %v164
    %v166 = vpop.f32.mrb[0].mxu0
    %167 = vmatprep.mubr.f32.mxu0 0.0
    %168 = vmatmul.mubr.f32.gmra.mrb[0].mxu0 %v54
    %v169 = vpop.f32.mrb[0].mxu0
    %v170 = vadd.f32 %v47, %v169
    %v171 = vpop.f32.mrb[0].mxu0
    %172 = vmatprep.mubr.f32.mxu0 0.0
    %173 = vmatmul.mubr.f32.gmra.mrb[0].mxu0 %v57
    %v174 = vpop.f32.mrb[0].mxu0
    %v175 = vadd.f32 %v47, %v174
    %v176 = vpop.f32.mrb[0].mxu0
    %177 = vmatprep.mubr.f32.mxu0 0.0
    %178 = vmatmul.mubr.f32.gmra.mrb[0].mxu0 %v60
    %v179 = vpop.f32.mrb[0].mxu0
    %v180 = vadd.f32 %v47, %v179
    %v181 = vpop.f32.mrb[0].mxu0
    %182 = vmatprep.mubr.f32.mxu0 0.0
    %183 = vmatmul.mubr.f32.gmra.mrb[0].mxu0 %v63
    %v184 = vpop.f32.mrb[0].mxu0
    %v185 = vadd.f32 %v47, %v184
    %v186 = vpop.f32.mrb[0].mxu0
    %187 = vmatprep.mubr.f32.mxu0 0.0
    %188 = vmatmul.mubr.f32.gmra.mrb[0].mxu0 %v66
    %v189 = vpop.f32.mrb[0].mxu0
    %v190 = vadd.f32 %v47, %v189
    %v191 = vpop.f32.mrb[0].mxu0
    %192 = vmatprep.mubr.f32.mxu0 0.0
    %193 = vmatmul.mubr.f32.gmra.mrb[0].mxu0 %v69
    %v194 = vpop.f32.mrb[0].mxu0
    %v195 = vadd.f32 %v47, %v194
    %v196 = vpop.f32.mrb[0].mxu0
    %197 = vmatprep.mubr.f32.mxu0 0.0
    %198 = vmatmul.mubr.f32.gmra.mrb[0].mxu0 %v72
    %v199 = vpop.f32.mrb[0].mxu0
    %v200 = vadd.f32 %v47, %v199
    %v201 = vpop.f32.mrb[0].mxu0
    %202 = vmatprep.mubr.f32.mxu0 0.0
    %203 = vmatmul.mubr.f32.gmra.mrb[0].mxu0 %v75
    %v204 = vpop.f32.mrb[0].mxu0
    %v205 = vadd.f32 %v47, %v204
    %v206 = vpop.f32.mrb[0].mxu0
    %207 = vmatprep.mubr.f32.mxu0 0.0
    %208 = vmatmul.mubr.f32.gmra.mrb[0].mxu0 %v78
    %v209 = vpop.f32.mrb[0].mxu0
    %v210 = vadd.f32 %v47, %v209
    %v211 = vpop.f32.mrb[0].mxu0
    %212 = vmatprep.mubr.f32.mxu0 0.0
    %213 = vmatmul.mubr.f32.gmra.mrb[0].mxu0 %v81
    %v214 = vpop.f32.mrb[0].mxu0
    %v215 = vadd.f32 %v47, %v214
    %v216 = vpop.f32.mrb[0].mxu0
    %217 = vmatprep.mubr.f32.mxu0 0.0
    %218 = vmatmul.mubr.f32.gmra.mrb[0].mxu0 %v84
    %v219 = vpop.f32.mrb[0].mxu0
    %v220 = vadd.f32 %v47, %v219
    %v221 = vpop.f32.mrb[0].mxu0
    %222 = vmatprep.mubr.f32.mxu0 0.0
    %223 = vmatmul.mubr.f32.gmra.mrb[0].mxu0 %v87
    %v224 = vpop.f32.mrb[0].mxu0
    %v225 = vadd.f32 %v47, %v224
    %v226 = vpop.f32.mrb[0].mxu0
    %227 = vmatprep.mubr.f32.mxu0 0.0
    %228 = vmatmul.mubr.f32.gmra.mrb[0].mxu0 %v90
    %v229 = vpop.f32.mrb[0].mxu0
    %v230 = vadd.f32 %v47, %v229
    %v231 = vpop.f32.mrb[0].mxu0
    %232 = vmatprep.mubr.f32.mxu0 0.0
    %233 = vmatmul.mubr.f32.gmra.mrb[0].mxu0 %v93
    %v234 = vpop.f32.mrb[0].mxu0
    %v235 = vadd.f32 %v47, %v234
    %v236 = vpop.f32.mrb[0].mxu0
    %237 = vmatprep.mubr.f32.mxu0 0.0
    %238 = vmatmul.mubr.f32.gmra.mrb[0].mxu0 %v96
    %v239 = vpop.f32.mrb[0].mxu0
    %v240 = vadd.f32 %v47, %v239
    %v241 = vpop.f32.mrb[0].mxu0
    %242 = vdwg.mxu0
    %v243 = vmax.f32 %v165, 0.0
    %v244 = vmax.f32 %v170, 0.0
    %v245 = vmax.f32 %v175, 0.0
    %v246 = vmax.f32 %v180, 0.0
    %v247 = vmax.f32 %v185, 0.0
    %v248 = vmax.f32 %v190, 0.0
    %v249 = vmax.f32 %v195, 0.0
    %v250 = vmax.f32 %v200, 0.0
    %v251 = vmax.f32 %v205, 0.0
    %v252 = vmax.f32 %v210, 0.0
    %v253 = vmax.f32 %v215, 0.0
    %v254 = vmax.f32 %v220, 0.0
    %v255 = vmax.f32 %v225, 0.0
    %v256 = vmax.f32 %v230, 0.0
    %v257 = vmax.f32 %v235, 0.0
    %v258 = vmax.f32 %v240, 0.0
    %v259 = vld [vmem:[%s3] sm:$0x1]
    %v261 = vlaneseq
    %v262 = vshrl.u32 %v261, 7
    %v263 = vsub.s32 0, %v262
    %v264 = vrot.slane %v259, %v263
    %v266 = vmul.f32 %v243, %v264
    %v267 = vmul.f32 %v244, %v264
    %v268 = vmul.f32 %v245, %v264
    %v269 = vmul.f32 %v246, %v264
    %v270 = vmul.f32 %v247, %v264
    %v271 = vmul.f32 %v248, %v264
    %v272 = vmul.f32 %v249, %v264
    %v273 = vmul.f32 %v250, %v264
    %v274 = vmul.f32 %v251, %v264
    %v275 = vmul.f32 %v252, %v264
    %v276 = vmul.f32 %v253, %v264
    %v277 = vmul.f32 %v254, %v264
    %v278 = vmul.f32 %v255, %v264
    %v279 = vmul.f32 %v256, %v264
    %v280 = vmul.f32 %v257, %v264
    %v281 = vmul.f32 %v258, %v264
    %v282 = vsel %vm49, %v266, 0.0
    %283 = vadd.xlane.f32.xlu0 %v282
    %v284 = vpop.xlane.xlu0 %283
    %v285 = vsel %vm49, %v267, 0.0
    %286 = vadd.xlane.f32.xlu0 %v285
    %v287 = vpop.xlane.xlu0 %286
    %v288 = vsel %vm49, %v268, 0.0
    %289 = vadd.xlane.f32.xlu0 %v288
    %v290 = vpop.xlane.xlu0 %289
    %v291 = vsel %vm49, %v269, 0.0
    %292 = vadd.xlane.f32.xlu0 %v291
    %v293 = vpop.xlane.xlu0 %292
    %v294 = vsel %vm49, %v270, 0.0
    %295 = vadd.xlane.f32.xlu0 %v294
    %v296 = vpop.xlane.xlu0 %295
    %v297 = vsel %vm49, %v271, 0.0
    %298 = vadd.xlane.f32.xlu0 %v297
    %v299 = vpop.xlane.xlu0 %298
    %v300 = vsel %vm49, %v272, 0.0
    %301 = vadd.xlane.f32.xlu0 %v300
    %v302 = vpop.xlane.xlu0 %301
    %v303 = vsel %vm49, %v273, 0.0
    %304 = vadd.xlane.f32.xlu0 %v303
    %v305 = vpop.xlane.xlu0 %304
    %v306 = vsel %vm49, %v274, 0.0
    %307 = vadd.xlane.f32.xlu0 %v306
    %v308 = vpop.xlane.xlu0 %307
    %v309 = vsel %vm49, %v275, 0.0
    %310 = vadd.xlane.f32.xlu0 %v309
    %v311 = vpop.xlane.xlu0 %310
    %v312 = vsel %vm49, %v276, 0.0
    %313 = vadd.xlane.f32.xlu0 %v312
    %v314 = vpop.xlane.xlu0 %313
    %v315 = vsel %vm49, %v277, 0.0
    %316 = vadd.xlane.f32.xlu0 %v315
    %v317 = vpop.xlane.xlu0 %316
    %v318 = vsel %vm49, %v278, 0.0
    %319 = vadd.xlane.f32.xlu0 %v318
    %v320 = vpop.xlane.xlu0 %319
    %v321 = vsel %vm49, %v279, 0.0
    %322 = vadd.xlane.f32.xlu0 %v321
    %v323 = vpop.xlane.xlu0 %322
    %v324 = vsel %vm49, %v280, 0.0
    %325 = vadd.xlane.f32.xlu0 %v324
    %v326 = vpop.xlane.xlu0 %325
    %v327 = vsel %vm49, %v281, 0.0
    %328 = vadd.xlane.f32.xlu0 %v327
    %v329 = vpop.xlane.xlu0 %328
    %s330 = sld [smem:[#allocation2]]
    %v331 = vstv %s330
    %v332 = vadd.f32 %v284, %v331
    %v333 = vadd.f32 %v287, %v331
    %v334 = vadd.f32 %v290, %v331
    %v335 = vadd.f32 %v293, %v331
    %v336 = vadd.f32 %v296, %v331
    %v337 = vadd.f32 %v299, %v331
    %v338 = vadd.f32 %v302, %v331
    %v339 = vadd.f32 %v305, %v331
    %v340 = vadd.f32 %v308, %v331
    %v341 = vadd.f32 %v311, %v331
    %v342 = vadd.f32 %v314, %v331
    %v343 = vadd.f32 %v317, %v331
    %v344 = vadd.f32 %v320, %v331
    %v345 = vadd.f32 %v323, %v331
    %v346 = vadd.f32 %v326, %v331
    %v347 = vadd.f32 %v329, %v331
    %v364 = vlaneseq
    %v365 = vand.u32 %v364, 127
    %v366 = vlaneseq
    %v367 = vshrl.u32 %v366, 7
    %v368 = vsub.s32 %v365, %v367
    %v369 = vrot.slane %v332, %v368
    %v370 = vadd.s32 %v365, 4294967288
    %v371 = vlaneseq
    %v372 = vshrl.u32 %v371, 7
    %v373 = vsub.s32 %v370, %v372
    %v374 = vrot.slane %v333, %v373
    %vm375 = vcmask 130112
    %v376 = vsel %vm375, %v374, %v369
    %v377 = vadd.s32 %v365, 4294967280
    %v378 = vlaneseq
    %v379 = vshrl.u32 %v378, 7
    %v380 = vsub.s32 %v377, %v379
    %v381 = vrot.slane %v334, %v380
    %vm382 = vcmask 195712
    %v383 = vsel %vm382, %v381, %v376
    %v384 = vadd.s32 %v365, 4294967272
    %v385 = vlaneseq
    %v386 = vshrl.u32 %v385, 7
    %v387 = vsub.s32 %v384, %v386
    %v388 = vrot.slane %v335, %v387
    %vm389 = vcmask 261312
    %v390 = vsel %vm389, %v388, %v383
    %v391 = vadd.s32 %v365, 4294967264
    %v392 = vlaneseq
    %v393 = vshrl.u32 %v392, 7
    %v394 = vsub.s32 %v391, %v393
    %v395 = vrot.slane %v336, %v394
    %vm396 = vcmask 326912
    %v397 = vsel %vm396, %v395, %v390
    %v398 = vadd.s32 %v365, 4294967256
    %v399 = vlaneseq
    %v400 = vshrl.u32 %v399, 7
    %v401 = vsub.s32 %v398, %v400
    %v402 = vrot.slane %v337, %v401
    %vm403 = vcmask 392512
    %v404 = vsel %vm403, %v402, %v397
    %v405 = vadd.s32 %v365, 4294967248
    %v406 = vlaneseq
    %v407 = vshrl.u32 %v406, 7
    %v408 = vsub.s32 %v405, %v407
    %v409 = vrot.slane %v338, %v408
    %vm410 = vcmask 458112
    %v411 = vsel %vm410, %v409, %v404
    %v412 = vadd.s32 %v365, 4294967240
    %v413 = vlaneseq
    %v414 = vshrl.u32 %v413, 7
    %v415 = vsub.s32 %v412, %v414
    %v416 = vrot.slane %v339, %v415
    %vm417 = vcmask 523712
    %v418 = vsel %vm417, %v416, %v411
    %v419 = vadd.s32 %v365, 4294967232
    %v420 = vlaneseq
    %v421 = vshrl.u32 %v420, 7
    %v422 = vsub.s32 %v419, %v421
    %v423 = vrot.slane %v340, %v422
    %vm424 = vcmask 589312
    %v425 = vsel %vm424, %v423, %v418
    %v426 = vadd.s32 %v365, 4294967224
    %v427 = vlaneseq
    %v428 = vshrl.u32 %v427, 7
    %v429 = vsub.s32 %v426, %v428
    %v430 = vrot.slane %v341, %v429
    %vm431 = vcmask 654912
    %v432 = vsel %vm431, %v430, %v425
    %v433 = vadd.s32 %v365, 4294967216
    %v434 = vlaneseq
    %v435 = vshrl.u32 %v434, 7
    %v436 = vsub.s32 %v433, %v435
    %v437 = vrot.slane %v342, %v436
    %vm438 = vcmask 720512
    %v439 = vsel %vm438, %v437, %v432
    %v440 = vadd.s32 %v365, 4294967208
    %v441 = vlaneseq
    %v442 = vshrl.u32 %v441, 7
    %v443 = vsub.s32 %v440, %v442
    %v444 = vrot.slane %v343, %v443
    %vm445 = vcmask 786112
    %v446 = vsel %vm445, %v444, %v439
    %v447 = vadd.s32 %v365, 4294967200
    %v448 = vlaneseq
    %v449 = vshrl.u32 %v448, 7
    %v450 = vsub.s32 %v447, %v449
    %v451 = vrot.slane %v344, %v450
    %vm452 = vcmask 851712
    %v453 = vsel %vm452, %v451, %v446
    %v454 = vadd.s32 %v365, 4294967192
    %v455 = vlaneseq
    %v456 = vshrl.u32 %v455, 7
    %v457 = vsub.s32 %v454, %v456
    %v458 = vrot.slane %v345, %v457
    %vm459 = vcmask 917312
    %v460 = vsel %vm459, %v458, %v453
    %v461 = vadd.s32 %v365, 4294967184
    %v462 = vlaneseq
    %v463 = vshrl.u32 %v462, 7
    %v464 = vsub.s32 %v461, %v463
    %v465 = vrot.slane %v346, %v464
    %vm466 = vcmask 982912
    %v467 = vsel %vm466, %v465, %v460
    %v468 = vadd.s32 %v365, 4294967176
    %v469 = vlaneseq
    %v470 = vshrl.u32 %v469, 7
    %v471 = vsub.s32 %v468, %v470
    %v472 = vrot.slane %v347, %v471
    %vm473 = vcmask 1048512
    %v474 = vsel %vm473, %v472, %v467
    %476 = vst [vmem:[#allocation3] sm:$0x1] %v474
    // Predicated region
    $region22: #{tpu_custom_call.1} parent=1 // pred_check
      _
    $region23: #{tpu_custom_call.1} parent=1 // pred_check_branch
      %478 = sbr.rel (0) target = $region25
    $region24: #{tpu_custom_call.1} parent=1 // pred_region
      %s480 = ssub.s32 16, 16
      %481 = vsyncadd [#allocation4], %s480
      %s483 = sshll.u32 [#allocation3], 4
      %s484 = int_to_ptr.vmem [resolvable:$true] %s483
      %486 = dma.vmem_to_hbm [thread:$0]  %s484, 16, %s5, [#allocation4]
    $region25: #{tpu_custom_call.1} parent=1 // pred_fallthru
      _
    // Predicated region
    $region26: #{tpu_custom_call.1} parent=1 // pred_check
      _
    $region27: #{tpu_custom_call.1} parent=1 // pred_check_branch
      %488 = sbr.rel (0) target = $region29
    $region28: #{tpu_custom_call.1} parent=1 // pred_region
      %489 = dma.done [#allocation4], 16
    $region29: #{tpu_custom_call.1} parent=1 // pred_fallthru
      _
    %490 = vsyncpa [#allocation4], 1

</llo_original>
